<compile_context>
chip_gen: v6e
topology: v6e:2x2x1
jax: 0.10.0
libtpu: 0.0.40
codegen_flags: <defaults>
</compile_context>

<pallas_src>
import functools
import numpy as np
import jax
import jax.numpy as jnp
from jax import lax
from jax.experimental import pallas as pl
from jax.experimental.pallas import tpu as pltpu


def _disalign_ce_kernel(logits_ref, tw_ref, num_out_ref, den_out_ref,
                        num_acc, den_acc, *, tn, tiles_per_chunk, n_rows):
    p = pl.program_id(0)          # parallel batch chunk (megacore on v7x)
    j = pl.program_id(1)          # reduction step within the chunk

    @pl.when(j == 0)
    def _init():
        num_acc[...] = jnp.zeros_like(num_acc)
        den_acc[...] = jnp.zeros_like(den_acc)

    # Logical (unclamped) tile index.  The index_map clamps the DMA to stay
    # in-bounds; here we mask by the unclamped index so clamped / ragged rows
    # contribute exactly 0.
    tile_idx = p * tiles_per_chunk + j
    row0 = tile_idx * tn

    logits = logits_ref[...].astype(jnp.float32)      # (tn, C) f32 math
    tw = tw_ref[...]                                  # (tn, 2) f32
    tgt_i = tw[:, 0:1].astype(jnp.int32)              # (tn, 1) class id
    w_t = tw[:, 1:2]                                  # (tn, 1) per-sample weight

    # row-validity mask (ragged last tile / clamped overflow tiles)
    row_ids = row0 + lax.broadcasted_iota(jnp.int32, (tn, 1), 0)
    valid = row_ids < n_rows                          # (tn, 1) bool

    # numerically stable log-softmax pieces along the class (lane) axis
    m = jnp.max(logits, axis=-1, keepdims=True)                       # (tn, 1)
    lse = jnp.log(jnp.sum(jnp.exp(logits - m), axis=-1, keepdims=True))

    # fused target-class select, directly from the raw logits (no z temp)
    cls_ids = lax.broadcasted_iota(jnp.int32, logits.shape, 1)
    x_t = jnp.sum(jnp.where(cls_ids == tgt_i, logits, 0.0),
                  axis=-1, keepdims=True)                             # (tn, 1)
    logp_t = x_t - m - lse                                            # (tn, 1)

    # masked accumulation (where, not multiply: 0 * NaN would still be NaN)
    num_acc[...] += jnp.sum(jnp.where(valid, -w_t * logp_t, 0.0),
                            axis=0, keepdims=True)                    # (1, 1)
    den_acc[...] += jnp.sum(jnp.where(valid, w_t, 0.0),
                            axis=0, keepdims=True)                    # (1, 1)

    @pl.when(j == pl.num_programs(1) - 1)
    def _finalize():
        num_out_ref[...] = num_acc[...]
        den_out_ref[...] = den_acc[...]


def _vmem_budgets():
    """(per-buffer f32 byte budget, vmem_limit_bytes) by TPU generation."""
    try:
        info = pltpu.get_tpu_info()
        cap = int(getattr(info, "vmem_capacity_bytes", 0) or 0)
    except Exception:
        cap = 0
    if cap >= 100 * 1024 * 1024:            # v5e / v6e: 128 MiB VMEM
        return 16 * 1024 * 1024, 96 * 1024 * 1024
    # v7x (64 MiB per TC) or unknown: keep conservative headroom
    return 8 * 1024 * 1024, 48 * 1024 * 1024


def _choose_row_tile(n, c, in_itemsize, per_buf_budget):
    """Row tile sized by an f32 working-set byte budget (no arbitrary cap)."""
    sub = max(8, 32 // in_itemsize)          # sublane multiple: f32 8, bf16 16
    if n <= sub:
        return n                             # block row dim == full array dim
    tn = per_buf_budget // max(1, 4 * c)     # budget in f32 bytes -> temps bounded
    tn = max(sub, (tn // sub) * sub)
    tn = min(tn, (n // sub) * sub)           # never exceed the array row extent
    return tn


def disalign_loss(output_logits, target, per_cls_weights):
    """Weighted cross-entropy (mean reduction) via a tiled Pallas kernel."""
    N, C = output_logits.shape
    dtype = output_logits.dtype              # keep native dtype (bf16 OK) in HBM
    itemsize = jnp.dtype(dtype).itemsize

    per_buf_budget, vmem_limit = _vmem_budgets()
    tn = _choose_row_tile(N, C, itemsize, per_buf_budget)

    num_tiles = -(-N // tn)
    n_chunks = 2 if num_tiles >= 2 else 1            # v7x has 2 TCs; free on v5e/v6e
    tiles_per_chunk = -(-num_tiles // n_chunks)
    last_tile = num_tiles - 1

    # pack (target, per-sample weight) into one tiny f32 side array; pad its
    # rows so its blocks are never ragged (padded rows are masked in-kernel).
    w_t = jnp.take(per_cls_weights.astype(jnp.float32), target.astype(jnp.int32))
    tw = jnp.stack([target.astype(jnp.float32), w_t], axis=1)          # (N, 2)
    side_rows = num_tiles * tn
    if side_rows != N:
        tw = jnp.pad(tw, ((0, side_rows - N), (0, 0)))

    def tile_map(p, j):
        # clamp so the DMA never goes past the last valid row tile; overflow
        # grid points are neutralized by the in-kernel row mask.
        return (jnp.minimum(p * tiles_per_chunk + j, last_tile), 0)

    kernel = functools.partial(_disalign_ce_kernel, tn=tn,
                               tiles_per_chunk=tiles_per_chunk, n_rows=N)

    cost = pl.CostEstimate(
        flops=6 * N * C,
        transcendentals=N * C,
        bytes_accessed=N * C * itemsize + N * 8 + n_chunks * 8,
    )

    num_parts, den_parts = pl.pallas_call(
        kernel,
        out_shape=(jax.ShapeDtypeStruct((n_chunks, 1), jnp.float32),
                   jax.ShapeDtypeStruct((n_chunks, 1), jnp.float32)),
        grid_spec=pltpu.PrefetchScalarGridSpec(
            num_scalar_prefetch=0,
            grid=(n_chunks, tiles_per_chunk),
            in_specs=[
                pl.BlockSpec((tn, C), tile_map),   # logits: no HBM pad copy
                pl.BlockSpec((tn, 2), tile_map),   # packed (target, weight)
            ],
            out_specs=[
                pl.BlockSpec((1, 1), lambda p, j: (p, 0)),   # partial numerator
                pl.BlockSpec((1, 1), lambda p, j: (p, 0)),   # partial denominator
            ],
            scratch_shapes=[pltpu.VMEM((1, 1), jnp.float32),
                            pltpu.VMEM((1, 1), jnp.float32)],
        ),
        compiler_params=pltpu.CompilerParams(
            dimension_semantics=("parallel", "arbitrary"),
            vmem_limit_bytes=int(vmem_limit),
        ),
        cost_estimate=cost,
    )(output_logits, tw)

    # NOTE: if all selected weights are zero this gives NaN/Inf, matching PyTorch.
    return jnp.sum(num_parts) / jnp.sum(den_parts)


def make_per_cls_weights(cls_num_list, p=1.5):
    """Deterministic parameter setup, mirroring the (buggy) PyTorch __init__."""
    m_list = jnp.asarray(np.array(cls_num_list), dtype=jnp.float32)
    per_cls_weights = m_list / jnp.sum(m_list)
    per_cls_weights = 1.0 / per_cls_weights
    per_cls_weights = per_cls_weights ** p
    # NOTE: the original code's final normalization goes to a misspelled
    # attribute and is never used in forward(), so we intentionally skip it.
    return per_cls_weights


def _reference_loss(logits, target, w):
    logp = jax.nn.log_softmax(logits.astype(jnp.float32), axis=-1)
    logp_t = jnp.take_along_axis(logp, target[:, None], axis=-1)[:, 0]
    w_t = w[target]
    return jnp.sum(-w_t * logp_t) / jnp.sum(w_t)


if __name__ == "__main__":
    key = jax.random.PRNGKey(0)
    N, C = 8, 16  # batch, num_classes

    # long-tailed class counts (deterministic)
    cls_num_list = [int(100 * (0.7 ** i)) + 1 for i in range(C)]
    per_cls_weights = make_per_cls_weights(cls_num_list, p=1.5)

    k_logits, k_target = jax.random.split(key)
    logits = jax.random.normal(k_logits, (N, C), dtype=jnp.float32)
    target = jax.random.randint(k_target, (N,), 0, C, dtype=jnp.int32)

    # f32 path: exact match vs reference
    loss = jax.block_until_ready(disalign_loss(logits, target, per_cls_weights))
    ref = _reference_loss(logits, target, per_cls_weights)
    assert jnp.allclose(loss, ref, rtol=1e-5, atol=1e-5), (loss, ref)

    # bf16 path: native narrow dtype into the kernel, f32 math inside
    logits_bf16 = logits.astype(jnp.bfloat16)
    loss_bf = jax.block_until_ready(
        disalign_loss(logits_bf16, target, per_cls_weights))
    ref_bf = _reference_loss(logits_bf16.astype(jnp.float32), target,
                             per_cls_weights)
    assert jnp.allclose(loss_bf, ref_bf, rtol=1e-2, atol=1e-2), (loss_bf, ref_bf)

    # ragged-row path (N not a multiple of the row tile): exercises the
    # in-kernel validity mask, the multi-tile reduction and the parallel axis.
    N2 = 10
    k2_l, k2_t = jax.random.split(jax.random.PRNGKey(0))
    logits2 = jax.random.normal(k2_l, (N2, C), dtype=jnp.float32)
    target2 = jax.random.randint(k2_t, (N2,), 0, C, dtype=jnp.int32)
    loss2 = jax.block_until_ready(disalign_loss(logits2, target2, per_cls_weights))
    ref2 = _reference_loss(logits2, target2, per_cls_weights)
    assert jnp.allclose(loss2, ref2, rtol=1e-5, atol=1e-5), (loss2, ref2)

    print("KERNEL_OK")
</pallas_src>

<mosaic_0001>
module attributes {stable_mosaic.version = 11 : i64} {
  func.func @_disalign_ce_kernel(%arg0: i32, %arg1: i32, %arg2: memref<8x16xf32, #tpu.memory_space<vmem>>, %arg3: memref<8x2xf32, #tpu.memory_space<vmem>>, %arg4: memref<1x1xf32, #tpu.memory_space<vmem>>, %arg5: memref<1x1xf32, #tpu.memory_space<vmem>>, %arg6: memref<1x1xf32, #tpu.memory_space<vmem>>, %arg7: memref<1x1xf32, #tpu.memory_space<vmem>>) attributes {dimension_semantics = [#tpu.dimension_semantics<parallel>, #tpu.dimension_semantics<arbitrary>], iteration_bounds = array<i64: 1, 1>, scalar_prefetch = 0 : i64, scratch_operands = 2 : i64, tpu.core_type = #tpu.core_type<tc>, window_params = [{transform_indices = @transform_0, window_bounds = array<i64: 8, 16>}, {transform_indices = @transform_1, window_bounds = array<i64: 8, 2>}, {transform_indices = @transform_2, window_bounds = array<i64: 1, 1>}, {transform_indices = @transform_3, window_bounds = array<i64: 1, 1>}]} {
    %c0_i32 = arith.constant 0 : i32
    %0 = arith.cmpi eq, %arg1, %c0_i32 : i32
    %1 = arith.extui %0 : i1 to i32
    %c0_i32_0 = arith.constant 0 : i32
    %2 = arith.cmpi ne, %1, %c0_i32_0 : i32
    scf.if %2 {
      %cst_23 = arith.constant 0.000000e+00 : f32
      %53 = vector.broadcast %cst_23 : f32 to vector<1x1xf32>
      %c0_24 = arith.constant 0 : index
      %c0_25 = arith.constant 0 : index
      %54 = vector.load %arg6[%c0_24, %c0_25] : memref<1x1xf32, #tpu.memory_space<vmem>>, vector<1x1xf32>
      tpu.vector_store %arg6[%c0_24, %c0_25], %53 {strides = array<i32>} : memref<1x1xf32, #tpu.memory_space<vmem>>, vector<1x1xf32>,
      %cst_26 = arith.constant 0.000000e+00 : f32
      %55 = vector.broadcast %cst_26 : f32 to vector<1x1xf32>
      %c0_27 = arith.constant 0 : index
      %c0_28 = arith.constant 0 : index
      %56 = vector.load %arg7[%c0_27, %c0_28] : memref<1x1xf32, #tpu.memory_space<vmem>>, vector<1x1xf32>
      tpu.vector_store %arg7[%c0_27, %c0_28], %55 {strides = array<i32>} : memref<1x1xf32, #tpu.memory_space<vmem>>, vector<1x1xf32>,
    } else {
    }
    %c1_i32 = arith.constant 1 : i32
    %3 = arith.muli %arg0, %c1_i32 : i32
    %4 = arith.addi %3, %arg1 : i32
    %c8_i32 = arith.constant 8 : i32
    %5 = arith.muli %4, %c8_i32 : i32
    %c0 = arith.constant 0 : index
    %c0_1 = arith.constant 0 : index
    %6 = vector.load %arg2[%c0, %c0_1] : memref<8x16xf32, #tpu.memory_space<vmem>>, vector<8x16xf32>
    %c0_2 = arith.constant 0 : index
    %c0_3 = arith.constant 0 : index
    %7 = vector.load %arg3[%c0_2, %c0_3] : memref<8x2xf32, #tpu.memory_space<vmem>>, vector<8x2xf32>
    %8 = vector.extract_strided_slice %7 {offsets = [0, 0], sizes = [8, 1], strides = [1, 1]} : vector<8x2xf32> to vector<8x1xf32>
    %9 = arith.fptosi %8 : vector<8x1xf32> to vector<8x1xi32>
    %10 = vector.extract_strided_slice %7 {offsets = [0, 1], sizes = [8, 1], strides = [1, 1]} : vector<8x2xf32> to vector<8x1xf32>
    %11 = tpu.iota {dimensions = array<i32: 0>} : vector<8x1xi32>
    %12 = vector.broadcast %5 : i32 to vector<8x1xi32>
    %13 = arith.addi %12, %11 : vector<8x1xi32>
    %c8_i32_4 = arith.constant 8 : i32
    %14 = vector.broadcast %c8_i32_4 : i32 to vector<8x1xi32>
    %15 = arith.cmpi slt, %13, %14 : vector<8x1xi32>
    %cst = arith.constant dense<0xFF800000> : vector<8xf32>
    %16 = vector.multi_reduction <maximumf>, %6, %cst [1] : vector<8x16xf32> to vector<8xf32>
    %17 = vector.shape_cast %16 : vector<8xf32> to vector<8x1xf32>
    %18 = vector.broadcast %17 : vector<8x1xf32> to vector<8x16xf32>
    %19 = arith.subf %6, %18 : vector<8x16xf32>
    %20 = math.exp %19 : vector<8x16xf32>
    %cst_5 = arith.constant dense<0.000000e+00> : vector<8xf32>
    %21 = vector.multi_reduction <add>, %20, %cst_5 [1] : vector<8x16xf32> to vector<8xf32>
    %22 = vector.shape_cast %21 : vector<8xf32> to vector<8x1xf32>
    %23 = math.log %22 : vector<8x1xf32>
    %24 = tpu.iota {dimensions = array<i32: 1>} : vector<8x16xi32>
    %25 = vector.broadcast %9 : vector<8x1xi32> to vector<8x16xi32>
    %26 = arith.cmpi eq, %24, %25 : vector<8x16xi32>
    %cst_6 = arith.constant 0.000000e+00 : f32
    %27 = vector.broadcast %cst_6 : f32 to vector<8x16xf32>
    %28 = arith.select %26, %6, %27 : vector<8x16xi1>, vector<8x16xf32>
    %cst_7 = arith.constant dense<0.000000e+00> : vector<8xf32>
    %29 = vector.multi_reduction <add>, %28, %cst_7 [1] : vector<8x16xf32> to vector<8xf32>
    %30 = vector.shape_cast %29 : vector<8xf32> to vector<8x1xf32>
    %31 = arith.subf %30, %17 : vector<8x1xf32>
    %32 = arith.subf %31, %23 : vector<8x1xf32>
    %c0_8 = arith.constant 0 : index
    %c0_9 = arith.constant 0 : index
    %33 = vector.load %arg6[%c0_8, %c0_9] : memref<1x1xf32, #tpu.memory_space<vmem>>, vector<1x1xf32>
    %cst_10 = arith.constant 0.000000e+00 : f32
    %34 = vector.broadcast %cst_10 : f32 to vector<8x1xf32>
    %35 = arith.subf %34, %10 : vector<8x1xf32>
    %36 = arith.mulf %35, %32 : vector<8x1xf32>
    %cst_11 = arith.constant 0.000000e+00 : f32
    %37 = vector.broadcast %cst_11 : f32 to vector<8x1xf32>
    %38 = arith.select %15, %36, %37 : vector<8x1xi1>, vector<8x1xf32>
    %cst_12 = arith.constant dense<0.000000e+00> : vector<1xf32>
    %39 = vector.multi_reduction <add>, %38, %cst_12 [0] : vector<8x1xf32> to vector<1xf32>
    %40 = vector.shape_cast %39 : vector<1xf32> to vector<1x1xf32>
    %41 = arith.addf %33, %40 : vector<1x1xf32>
    %c0_13 = arith.constant 0 : index
    %c0_14 = arith.constant 0 : index
    %42 = vector.load %arg6[%c0_13, %c0_14] : memref<1x1xf32, #tpu.memory_space<vmem>>, vector<1x1xf32>
    tpu.vector_store %arg6[%c0_13, %c0_14], %41 {strides = array<i32>} : memref<1x1xf32, #tpu.memory_space<vmem>>, vector<1x1xf32>,
    %c0_15 = arith.constant 0 : index
    %c0_16 = arith.constant 0 : index
    %43 = vector.load %arg7[%c0_15, %c0_16] : memref<1x1xf32, #tpu.memory_space<vmem>>, vector<1x1xf32>
    %cst_17 = arith.constant 0.000000e+00 : f32
    %44 = vector.broadcast %cst_17 : f32 to vector<8x1xf32>
    %45 = arith.select %15, %10, %44 : vector<8x1xi1>, vector<8x1xf32>
    %cst_18 = arith.constant dense<0.000000e+00> : vector<1xf32>
    %46 = vector.multi_reduction <add>, %45, %cst_18 [0] : vector<8x1xf32> to vector<1xf32>
    %47 = vector.shape_cast %46 : vector<1xf32> to vector<1x1xf32>
    %48 = arith.addf %43, %47 : vector<1x1xf32>
    %c0_19 = arith.constant 0 : index
    %c0_20 = arith.constant 0 : index
    %49 = vector.load %arg7[%c0_19, %c0_20] : memref<1x1xf32, #tpu.memory_space<vmem>>, vector<1x1xf32>
    tpu.vector_store %arg7[%c0_19, %c0_20], %48 {strides = array<i32>} : memref<1x1xf32, #tpu.memory_space<vmem>>, vector<1x1xf32>,
    %c0_i32_21 = arith.constant 0 : i32
    %50 = arith.cmpi eq, %arg1, %c0_i32_21 : i32
    %51 = arith.extui %50 : i1 to i32
    %c0_i32_22 = arith.constant 0 : i32
    %52 = arith.cmpi ne, %51, %c0_i32_22 : i32
    scf.if %52 {
      %c0_23 = arith.constant 0 : index
      %c0_24 = arith.constant 0 : index
      %53 = vector.load %arg6[%c0_23, %c0_24] : memref<1x1xf32, #tpu.memory_space<vmem>>, vector<1x1xf32>
      %c0_25 = arith.constant 0 : index
      %c0_26 = arith.constant 0 : index
      %54 = vector.load %arg4[%c0_25, %c0_26] : memref<1x1xf32, #tpu.memory_space<vmem>>, vector<1x1xf32>
      tpu.vector_store %arg4[%c0_25, %c0_26], %53 {strides = array<i32>} : memref<1x1xf32, #tpu.memory_space<vmem>>, vector<1x1xf32>,
      %c0_27 = arith.constant 0 : index
      %c0_28 = arith.constant 0 : index
      %55 = vector.load %arg7[%c0_27, %c0_28] : memref<1x1xf32, #tpu.memory_space<vmem>>, vector<1x1xf32>
      %c0_29 = arith.constant 0 : index
      %c0_30 = arith.constant 0 : index
      %56 = vector.load %arg5[%c0_29, %c0_30] : memref<1x1xf32, #tpu.memory_space<vmem>>, vector<1x1xf32>
      tpu.vector_store %arg5[%c0_29, %c0_30], %55 {strides = array<i32>} : memref<1x1xf32, #tpu.memory_space<vmem>>, vector<1x1xf32>,
    } else {
    }
    return
  }
  func.func @transform_0(%arg0: i32, %arg1: i32) -> (i32, i32) {
    %c1_i32 = arith.constant 1 : i32
    %0 = arith.muli %arg0, %c1_i32 : i32
    %1 = arith.addi %0, %arg1 : i32
    %c0_i32 = arith.constant 0 : i32
    %2 = arith.minsi %1, %c0_i32 : i32
    %c0_i32_0 = arith.constant 0 : i32
    %c0_i32_1 = arith.constant 0 : i32
    return %2, %c0_i32_0 : i32, i32
  }
  func.func @transform_1(%arg0: i32, %arg1: i32) -> (i32, i32) {
    %c1_i32 = arith.constant 1 : i32
    %0 = arith.muli %arg0, %c1_i32 : i32
    %1 = arith.addi %0, %arg1 : i32
    %c0_i32 = arith.constant 0 : i32
    %2 = arith.minsi %1, %c0_i32 : i32
    %c0_i32_0 = arith.constant 0 : i32
    %c0_i32_1 = arith.constant 0 : i32
    return %2, %c0_i32_0 : i32, i32
  }
  func.func @transform_2(%arg0: i32, %arg1: i32) -> (i32, i32) {
    %c0_i32 = arith.constant 0 : i32
    %c0_i32_0 = arith.constant 0 : i32
    return %arg0, %c0_i32 : i32, i32
  }
  func.func @transform_3(%arg0: i32, %arg1: i32) -> (i32, i32) {
    %c0_i32 = arith.constant 0 : i32
    %c0_i32_0 = arith.constant 0 : i32
    return %arg0, %c0_i32 : i32, i32
  }
}

</mosaic_0001>

<llo_original>
// kernel: tpu_custom_call.1
$region0: #{tpu_custom_call.1}
  #allocation0 [shape = 'u32[]', space=smem, size = 0x4, offset = 0x4, fixed_abs, tag = 'smem constant byte address 0x4 - core index']
  #allocation1 [shape = 'u32[144,128]{1,0:T(1,128)}', space=vmem, size = 0x12000, scoped, tag = 'internal scratch']
  #allocation2 [shape = 'f32[1,1]{1,0:T(1,128)}', space=vmem, size = 0x200, scoped, tag = 'scratch operand']
  #allocation3 [shape = 'f32[1,1]{1,0:T(1,128)}', space=vmem, size = 0x200, scoped, tag = 'scratch operand']
  %s0 = inlined_call_operand.vmem [shape: f32[8,16], index: 0, kind: input, shape index: {}]
  %s1 = inlined_call_operand.vmem [shape: f32[8,2], index: 1, kind: input, shape index: {}]
  %s2 = inlined_call_operand.hbm [shape: f32[1,1], index: 2, kind: output, shape index: {0}]
  %s3 = inlined_call_operand.hbm [shape: f32[1,1], index: 3, kind: output, shape index: {1}]
  %4 = xla_tuple %s2, %s3
  %s5 = sld [smem:[#allocation0]]
  $region34: #{tpu_custom_call.1} parent=0
    _
  %s7 = ssub.s32 1, %s5
  %s8 = scalar_select 0, %s7, %s5
  $region1: #{tpu_custom_call.1} parent=0
    #allocation4 [shape = 'u8[512]{0}', space=vmem, size = 0x400, scoped, tag = 'output window, operand 0, single buffered']
    #allocation5 [shape = 's32[1]{0}', space=sflag, size = 0x4, scoped, tag = 'scoped memory for tpu_custom_call.1']
    #allocation6 [shape = 'u8[512]{0}', space=vmem, size = 0x400, scoped, tag = 'output window, operand 1, single buffered']
    #allocation7 [shape = 's32[1]{0}', space=sflag, size = 0x4, scoped, tag = 'scoped memory for tpu_custom_call.1']
    %9 = vsyncpa [#allocation5], 0
    %10 = vsyncpa [#allocation7], 0
    // Predicated region
    $region2: #{tpu_custom_call.1} parent=1 // pred_check
      _
    $region3: #{tpu_custom_call.1} parent=1 // pred_check_branch
      %12 = sbr.rel (0) target = $region5
    $region4: #{tpu_custom_call.1} parent=1 // pred_region
      %s13 = sadd.s32 0, 0
      %p14 = scmp.lt.s32.totalorder %s13, 0
      %s15 = scalar_select %p14, %s13, 0
      %p16 = scmp.lt.s32.totalorder %s15, 0
      %s17 = scalar_select %p16, %s15, 0
      %s18 = smul.addr %s17, 8
      %s19 = scalar_lea.vmem %s0, %s18
      %s20 = sadd.s32 0, 0
      %p21 = scmp.lt.s32.totalorder %s20, 0
      %s22 = scalar_select %p21, %s20, 0
    $region5: #{tpu_custom_call.1} parent=1 // pred_fallthru
      _
    // Predicated region
    $region6: #{tpu_custom_call.1} parent=1 // pred_check
      _
    $region7: #{tpu_custom_call.1} parent=1 // pred_check_branch
      %24 = sbr.rel (0) target = $region9
    $region8: #{tpu_custom_call.1} parent=1 // pred_region
      %s25 = sadd.s32 0, 0
      %p26 = scmp.lt.s32.totalorder %s25, 0
      %s27 = scalar_select %p26, %s25, 0
      %p28 = scmp.lt.s32.totalorder %s27, 0
      %s29 = scalar_select %p28, %s27, 0
      %s30 = smul.addr %s29, 8
      %s31 = scalar_lea.vmem %s1, %s30
      %s32 = sadd.s32 0, 0
      %p33 = scmp.lt.s32.totalorder %s32, 0
      %s34 = scalar_select %p33, %s32, 0
    $region9: #{tpu_custom_call.1} parent=1 // pred_fallthru
      _
    %s35 = sadd.s32 0, 0
    %p36 = scmp.lt.s32.totalorder %s35, 0
    %s37 = scalar_select %p36, %s35, 0
    %p38 = scmp.lt.s32.totalorder %s37, 0
    %s39 = scalar_select %p38, %s37, 0
    %s40 = smul.addr %s39, 8
    %s41 = scalar_lea.vmem %s0, %s40
    %s42 = sadd.s32 0, 0
    %p43 = scmp.lt.s32.totalorder %s42, 0
    %s44 = scalar_select %p43, %s42, 0
    %p45 = scmp.lt.s32.totalorder %s44, 0
    %s46 = scalar_select %p45, %s44, 0
    %s47 = smul.addr %s46, 8
    %s48 = scalar_lea.vmem %s1, %s47
    %s49 = sadd.s32 0, 0
    %p50 = scmp.lt.s32.totalorder %s49, 0
    %s51 = scalar_select %p50, %s49, 0
    %p52 = scmp.lt.s32.totalorder %s51, 0
    %s53 = scalar_select %p52, %s51, 0
    %s54 = smul.addr %s53, 8
    %s55 = scalar_lea.vmem %s0, %s54
    %s56 = sadd.s32 0, 0
    %p57 = scmp.lt.s32.totalorder %s56, 0
    %s58 = scalar_select %p57, %s56, 0
    %s59 = sadd.s32 0, 0
    %p60 = scmp.lt.s32.totalorder %s59, 0
    %s61 = scalar_select %p60, %s59, 0
    %p62 = scmp.lt.s32.totalorder %s61, 0
    %s63 = scalar_select %p62, %s61, 0
    %s64 = smul.addr %s63, 8
    %s65 = scalar_lea.vmem %s1, %s64
    %s66 = sadd.s32 0, 0
    %p67 = scmp.lt.s32.totalorder %s66, 0
    %s68 = scalar_select %p67, %s66, 0
    %p69 = scmp.eq.s32.totalorder 0, 0
    // Predicated region
    $region10: #{tpu_custom_call.1} parent=1 // pred_check
      %p70 = pneg %p69
    $region11: #{tpu_custom_call.1} parent=1 // pred_check_branch
      %72 = sbr.rel (%p70) target = $region13
    $region12: #{tpu_custom_call.1} parent=1 // pred_region
      %vm73 = vcmask 0
      %74 = vst.msk [vmem:[#allocation2] sm:$0x1] %vm73, 0.0
      %75 = vst.msk [vmem:[#allocation3] sm:$0x1] %vm73, 0.0
    $region13: #{tpu_custom_call.1} parent=1 // pred_fallthru
      _
    %s76 = sadd.s32 0, 0
    %s77 = smul.u32 %s76, 8
    %v78 = vld [vmem:[%s55] sm:$0xff]
    %v79 = vld [vmem:[%s65] sm:$0xff]
    %v80 = vcvt.f32.s32.to.zero.pseudo %v79
    %v81 = vlaneseq
    %v82 = vshrl.u32 %v81, 7
    %v83 = vstv %s77
    %v84 = vadd.s32 %v83, %v82
    %vm85 = vcmp.lt.s32.totalorder %v84, 8
    %vm86 = vcmask 130048
    %v87 = vsel %vm86, %v78, -inf
    %88 = vmax.xlane.f32.xlu0 %v87
    %v89 = vpop.xlane.xlu0 %88
    %v90 = vsub.f32 %v78, %v89
    %v91 = vmul.f32 %v90, 1.442695
    %v92 = vpow.pop %v91
    %v93 = vsel %vm86, %v92, 0.0
    %94 = vadd.xlane.f32.xlu0 %v93
    %v95 = vpop.xlane.xlu0 %94
    %v96 = vlog2.pop %v95
    %v97 = vmul.f32 %v96, 0.6931472
    %v98 = vlaneseq
    %v99 = vand.u32 %v98, 127
    %100 = vset.pattern.permute.xlu0 0
    %101 = vperm.xlu0 %100, %v80
    %v102 = vpop.permute.xlu0 %101
    %vm103 = vcmp.eq.s32.totalorder %v99, %v102
    %v104 = vsel %vm103, %v78, 0.0
    %v105 = vsel %vm86, %v104, 0.0
    %106 = vadd.xlane.f32.xlu0 %v105
    %v107 = vpop.xlane.xlu0 %106
    %v108 = vsub.f32 %v107, %v89
    %v109 = vsub.f32 %v108, %v97
    %v110 = vld [vmem:[#allocation2] sm:$0x1]
    %v111 = vsub.f32 0.0, %v79
    %v112 = vmul.f32 %v111, %v109
    %v113 = vsel %vm85, %v112, 0.0
    %vm114 = vcmask 15368
    %v115 = vsel %vm114, %v113, 0.0
    %v116 = vrot.slane %v115, 4
    %v117 = vadd.f32 %v115, %v116
    %v118 = vrot.slane %v117, 2
    %v119 = vadd.f32 %v117, %v118
    %v120 = vrot.slane %v119, 1
    %v121 = vadd.f32 %v119, %v120
    %v124 = vunpack.c.l.s4 1966171168
    %v125 = vunpack.c.0.s8 %v124
    %v126 = vlaneseq
    %v127 = vshrl.u32 %v126, 7
    %v128 = vsub.s32 %v125, %v127
    %v129 = vrot.slane %v121, %v128
    %v131 = vunpack.c.l.s4 1966171168
    %v132 = vunpack.c.0.s8 %v131
    %v133 = vlaneseq
    %v134 = vshrl.u32 %v133, 7
    %v135 = vsub.s32 %v132, %v134
    %v136 = vrot.slane %v129, %v135
    %137 = vrot.lane.b32.xlu0 %v136, 127
    %v138 = vpop.permute.xlu0 %137
    %v140 = vadd.f32 %v110, %v138
    %vm141 = vcmask 0
    %142 = vst.msk [vmem:[#allocation2] sm:$0x1] %vm141, %v140
    %v143 = vld [vmem:[#allocation3] sm:$0x1]
    %v144 = vsel %vm85, %v79, 0.0
    %v145 = vsel %vm114, %v144, 0.0
    %v146 = vrot.slane %v145, 4
    %v147 = vadd.f32 %v145, %v146
    %v148 = vrot.slane %v147, 2
    %v149 = vadd.f32 %v147, %v148
    %v150 = vrot.slane %v149, 1
    %v151 = vadd.f32 %v149, %v150
    %v154 = vunpack.c.l.s4 1966171168
    %v155 = vunpack.c.0.s8 %v154
    %v156 = vlaneseq
    %v157 = vshrl.u32 %v156, 7
    %v158 = vsub.s32 %v155, %v157
    %v159 = vrot.slane %v151, %v158
    %v161 = vunpack.c.l.s4 1966171168
    %v162 = vunpack.c.0.s8 %v161
    %v163 = vlaneseq
    %v164 = vshrl.u32 %v163, 7
    %v165 = vsub.s32 %v162, %v164
    %v166 = vrot.slane %v159, %v165
    %167 = vrot.lane.b32.xlu0 %v166, 127
    %v168 = vpop.permute.xlu0 %167
    %v170 = vadd.f32 %v143, %v168
    %171 = vst.msk [vmem:[#allocation3] sm:$0x1] %vm141, %v170
    // Predicated region
    $region14: #{tpu_custom_call.1} parent=1 // pred_check
      %p172 = pneg %p69
    $region15: #{tpu_custom_call.1} parent=1 // pred_check_branch
      %174 = sbr.rel (%p172) target = $region17
    $region16: #{tpu_custom_call.1} parent=1 // pred_region
      %v175 = vld [vmem:[#allocation2] sm:$0x1]
      %176 = vst.msk [vmem:[#allocation4] sm:$0x1] %vm141, %v175
      %v177 = vld [vmem:[#allocation3] sm:$0x1]
      %178 = vst.msk [vmem:[#allocation6] sm:$0x1] %vm141, %v177
    $region17: #{tpu_custom_call.1} parent=1 // pred_fallthru
      _
    // Predicated region
    $region18: #{tpu_custom_call.1} parent=1 // pred_check
      _
    $region19: #{tpu_custom_call.1} parent=1 // pred_check_branch
      %180 = sbr.rel (0) target = $region21
    $region20: #{tpu_custom_call.1} parent=1 // pred_region
      %s182 = ssub.s32 16, 16
      %183 = vsyncadd [#allocation5], %s182
      %s185 = sshll.u32 [#allocation4], 4
      %s186 = int_to_ptr.vmem [resolvable:$true] %s185
      %188 = dma.vmem_to_hbm [thread:$0]  %s186, 16, %s2, [#allocation5]
    $region21: #{tpu_custom_call.1} parent=1 // pred_fallthru
      _
    // Predicated region
    $region22: #{tpu_custom_call.1} parent=1 // pred_check
      _
    $region23: #{tpu_custom_call.1} parent=1 // pred_check_branch
      %190 = sbr.rel (0) target = $region25
    $region24: #{tpu_custom_call.1} parent=1 // pred_region
      %s192 = ssub.s32 16, 16
      %193 = vsyncadd [#allocation7], %s192
      %s195 = sshll.u32 [#allocation6], 4
      %s196 = int_to_ptr.vmem [resolvable:$true] %s195
      %198 = dma.vmem_to_hbm [thread:$0]  %s196, 16, %s3, [#allocation7]
    $region25: #{tpu_custom_call.1} parent=1 // pred_fallthru
      _
    // Predicated region
    $region26: #{tpu_custom_call.1} parent=1 // pred_check
      _
    $region27: #{tpu_custom_call.1} parent=1 // pred_check_branch
      %200 = sbr.rel (0) target = $region29
    $region28: #{tpu_custom_call.1} parent=1 // pred_region
      %201 = dma.done [#allocation5], 16
    $region29: #{tpu_custom_call.1} parent=1 // pred_fallthru
      _
    // Predicated region
    $region30: #{tpu_custom_call.1} parent=1 // pred_check
      _
    $region31: #{tpu_custom_call.1} parent=1 // pred_check_branch
      %203 = sbr.rel (0) target = $region33
    $region32: #{tpu_custom_call.1} parent=1 // pred_region
      %204 = dma.done [#allocation7], 16
    $region33: #{tpu_custom_call.1} parent=1 // pred_fallthru
      _
    %205 = vsyncpa [#allocation5], 1
    %206 = vsyncpa [#allocation7], 1

</llo_original>
